<compile_context>
chip_gen: v5e
topology: v5e:2x2
jax: 0.10.0
libtpu: 0.0.40
codegen_flags: <defaults>
</compile_context>

<pallas_src>
import functools

import jax
import jax.numpy as jnp
from jax.experimental import pallas as pl
from jax.experimental.pallas import tpu as pltpu


# ---------------------------------------------------------------------------
# helpers
# ---------------------------------------------------------------------------
def _round_up(x, m):
    return ((x + m - 1) // m) * m


def _vmem_params():
    """(vmem_limit_bytes, tiling_budget_bytes) derived from the actual chip.
    Fallback is the v7x per-TensorCore minimum (64 MiB) so it is safe everywhere;
    on v5e/v6e (128 MiB) this grows the row tiles automatically."""
    phys = 64 * (1 << 20)
    try:
        info = pltpu.get_tpu_info()
        cap = getattr(info, "vmem_capacity_bytes", None)
        if cap:
            phys = int(cap)
    except Exception:
        pass
    limit = max(phys - 12 * (1 << 20), 32 * (1 << 20))   # headroom: compiler scratch/sems
    budget = max(limit - 8 * (1 << 20), 24 * (1 << 20))  # working-set budget for tiling
    return limit, budget


def _pick_tile_rows(rows, per_row_bytes, fixed_bytes, requested, budget):
    """Largest row tile (multiple of 8, <= requested, <= rows rounded to 8) whose
    working set fits the VMEM budget.  Rows are then padded to a tile multiple."""
    tm = _round_up(min(requested, _round_up(rows, 8)), 8)
    while tm > 8 and fixed_bytes + tm * per_row_bytes > budget:
        tm = _round_up(max(tm // 2, 8), 8)
    return tm


def _pad2(a, rows_p, cols_p):
    pr, pc = rows_p - a.shape[0], cols_p - a.shape[1]
    if pr == 0 and pc == 0:
        return a
    return jnp.pad(a, ((0, pr), (0, pc)))


# ---------------------------------------------------------------------------
# K1: fused RMSNorm (+folded scales) + concatenated QKV projection
# ---------------------------------------------------------------------------
def _rms_qkv_kernel(x_ref, w_ref, o_ref, *, eps):
    # x_ref: (TM, D) f32 | w_ref: (D, Np) bf16 (scales + sm_scale pre-folded)
    # o_ref: (TM, Np) bf16
    x = x_ref[...].astype(jnp.float32)
    d = x.shape[-1]
    # matches torch: x.norm(2, -1, keepdim=True) * D**-0.5, eps added to the *norm*
    norm = jnp.sqrt(jnp.sum(x * x, axis=-1, keepdims=True)) * (d ** -0.5)
    inv = 1.0 / (norm + eps)               # exact: RMSNorm error would compound via QKV matmul
    y = (x * inv).astype(jnp.bfloat16)     # bf16 feed -> full-rate MXU on all generations
    # TODO(synk): nn.Dropout(p=0.0) is the identity in forward; nothing to emit.
    o_ref[...] = jnp.dot(y, w_ref[...],
                         preferred_element_type=jnp.float32).astype(o_ref.dtype)


def _fused_norm_qkv(x2p, w_t, *, eps, tile_rows, vmem_limit):
    rows_p, d = x2p.shape
    n = w_t.shape[1]
    return pl.pallas_call(
        functools.partial(_rms_qkv_kernel, eps=eps),
        out_shape=jax.ShapeDtypeStruct((rows_p, n), jnp.bfloat16),
        grid_spec=pltpu.PrefetchScalarGridSpec(
            num_scalar_prefetch=0,
            grid=(rows_p // tile_rows,),
            in_specs=[
                pl.BlockSpec((tile_rows, d), lambda i: (i, 0)),
                # Invariant weight slab (constant index_map).
                # TODO(synk): pipeline_mode=pl.Buffered(1) once single-buffered
                # invariant blocks are supported; the budget charges 2x for now.
                pl.BlockSpec((d, n), lambda i: (0, 0)),
            ],
            out_specs=pl.BlockSpec((tile_rows, n), lambda i: (i, 0)),
        ),
        compiler_params=pltpu.CompilerParams(
            dimension_semantics=("parallel",),
            vmem_limit_bytes=vmem_limit),
    )(x2p, w_t)


# ---------------------------------------------------------------------------
# K2: softmax attention, one batch per grid point, fed from the flat qkv buffer
# ---------------------------------------------------------------------------
def _attn_kernel(qkv_ref, o_ref, *, H, G, hd, nq, nkv, nq_pad):
    # qkv_ref: (S, Np) bf16 (one batch; sm_scale already folded into the q columns)
    # o_ref  : (S, nq_pad) bf16 in "s (h d)" order (lane-dense store)
    qkv = qkv_ref[...]
    s_len = qkv.shape[0]
    outs = []
    # H is a small compile-time constant -> static unroll over heads.
    # TODO(synk): merge heads into the MXU M dimension for G==1 and use
    #             flash-style KV tiling before scaling S (S*S f32 scores per head now).
    for h in range(H):
        g = h if G == H else 0
        q = qkv[:, h * hd:(h + 1) * hd]                       # bf16 (S, hd)
        k = qkv[:, nq + g * hd: nq + (g + 1) * hd]            # bf16 (S, hd)
        v = qkv[:, nq + nkv + g * hd: nq + nkv + (g + 1) * hd]
        s = jax.lax.dot_general(q, k, (((1,), (1,)), ((), ())),
                                preferred_element_type=jnp.float32)  # bf16 MXU, f32 acc
        m = jnp.max(s, axis=-1, keepdims=True)
        p = jnp.exp(s - m)                                    # f32 elementwise (v5e-safe)
        inv = pl.reciprocal(jnp.sum(p, axis=-1, keepdims=True), approx=True)
        p = (p * inv).astype(jnp.bfloat16)                    # bf16 feed for p @ v
        outs.append(jnp.dot(p, v, preferred_element_type=jnp.float32))
    if nq_pad > nq:
        outs.append(jnp.zeros((s_len, nq_pad - nq), jnp.float32))
    o_ref[...] = jnp.concatenate(outs, axis=-1).astype(o_ref.dtype)


def _attention_flat(qkv, *, B, S, H, G, hd, nq, nkv, nq_pad):
    n_pad = qkv.shape[1]
    # TODO(synk): also split the S axis when B < 2 so both v7x TensorCores are busy.
    return pl.pallas_call(
        functools.partial(_attn_kernel, H=H, G=G, hd=hd, nq=nq, nkv=nkv,
                          nq_pad=nq_pad),
        out_shape=jax.ShapeDtypeStruct((B * S, nq_pad), jnp.bfloat16),
        grid_spec=pltpu.PrefetchScalarGridSpec(
            num_scalar_prefetch=0,
            grid=(B,),
            in_specs=[pl.BlockSpec((S, n_pad), lambda b: (b, 0))],
            out_specs=pl.BlockSpec((S, nq_pad), lambda b: (b, 0)),
        ),
        compiler_params=pltpu.CompilerParams(
            dimension_semantics=("parallel",)),
    )(qkv)


# ---------------------------------------------------------------------------
# K3: output projection + residual add
# ---------------------------------------------------------------------------
def _oproj_residual_kernel(a_ref, w_ref, r_ref, o_ref):
    # a_ref: (TM, Nqp) bf16 | w_ref: (Nqp, Dp) bf16 | r_ref: (TM, Dp) f32 | o_ref: f32
    acc = jnp.dot(a_ref[...], w_ref[...], preferred_element_type=jnp.float32)
    o_ref[...] = r_ref[...] + acc


def _oproj_residual(a2p, w_t, r2p, *, tile_rows, vmem_limit):
    rows_p, nqp = a2p.shape
    dp = w_t.shape[1]
    return pl.pallas_call(
        _oproj_residual_kernel,
        out_shape=jax.ShapeDtypeStruct((rows_p, dp), jnp.float32),
        grid_spec=pltpu.PrefetchScalarGridSpec(
            num_scalar_prefetch=0,
            grid=(rows_p // tile_rows,),
            in_specs=[
                pl.BlockSpec((tile_rows, nqp), lambda i: (i, 0)),
                pl.BlockSpec((nqp, dp), lambda i: (0, 0)),
                pl.BlockSpec((tile_rows, dp), lambda i: (i, 0)),
            ],
            out_specs=pl.BlockSpec((tile_rows, dp), lambda i: (i, 0)),
        ),
        compiler_params=pltpu.CompilerParams(
            dimension_semantics=("parallel",),
            vmem_limit_bytes=vmem_limit),
    )(a2p, w_t, r2p)


# ---------------------------------------------------------------------------
# Full MHA.forward
# ---------------------------------------------------------------------------
def mha_forward(x, norm_scale, split_scale, wq, wk, wv, wo, *,
                head_dims=64, gqa_num_heads=2, eps=1e-8, tile_rows=512):
    """Pallas MHA.forward (freqs_cis=None path; block_mask is unused by the module).

    x: (B, S, D) f32. Weights in torch nn.Linear layout:
      wq: (H*hd, D), wk/wv: (G*hd, D), wo: (D, H*hd).
    Returns (B, S, D) = x + o_proj(softmax(q k^T / sqrt(hd)) v),
    with q/k/v = Linear(split_scale * RMSNorm(x)).
    """
    B, S, D = x.shape
    hd = head_dims
    H = D // hd
    G = gqa_num_heads
    nq, nkv = H * hd, G * hd
    assert wq.shape == (nq, D) and wk.shape == (nkv, D) and wv.shape == (nkv, D)
    assert wo.shape == (D, nq)
    assert H == G or G == 1, "module semantics require num_heads == gqa_num_heads (or 1)"
    assert S % 8 == 0, "seq length must be a multiple of 8 (sublane tiling)"

    vmem_limit, budget = _vmem_params()
    rows = B * S
    x2 = x.reshape(rows, D).astype(jnp.float32)

    # ---- K1: RMSNorm + folded scales + fused, lane-dense bf16 QKV weight ------
    # (g*s*x_norm) @ W^T == x_norm @ (diag(g*s) @ W^T); sm_scale folded into wq.
    combined = (norm_scale * split_scale).astype(jnp.float32)            # (D,)
    wq_s = wq.astype(jnp.float32) * (hd ** -0.5)
    w_qkv_t = combined[:, None] * jnp.concatenate(
        [wq_s, wk.astype(jnp.float32), wv.astype(jnp.float32)], axis=0).T  # (D, nq+2*nkv)
    n_tot = w_qkv_t.shape[1]
    n_pad = _round_up(n_tot, 128)
    w_qkv_t = _pad2(w_qkv_t, D, n_pad).astype(jnp.bfloat16)

    per_row1 = 2 * D * 4 + 2 * n_pad * 2          # dbuf f32 input + dbuf bf16 output
    fixed1 = 2 * D * n_pad * 2                    # bf16 weight slab (charged 2x)
    tm1 = _pick_tile_rows(rows, per_row1, fixed1, tile_rows, budget)
    rows_p1 = _round_up(rows, tm1)
    x2p = _pad2(x2, rows_p1, D)
    qkv = _fused_norm_qkv(x2p, w_qkv_t, eps=eps, tile_rows=tm1,
                          vmem_limit=vmem_limit)  # (rows_p1, n_pad) bf16

    # ---- K2: per-batch attention directly on the flat bf16 qkv buffer ---------
    nq_pad = _round_up(nq, 128)
    attn = _attention_flat(qkv, B=B, S=S, H=H, G=G, hd=hd, nq=nq, nkv=nkv,
                           nq_pad=nq_pad)         # (B*S, nq_pad) bf16, "b s (h d)"

    # ---- K3: o_proj + residual -------------------------------------------------
    dp = _round_up(D, 128)
    wo_t = _pad2(wo.T.astype(jnp.float32), nq_pad, dp).astype(jnp.bfloat16)  # (nq_pad, Dp)
    per_row3 = 2 * nq_pad * 2 + 2 * dp * 4 + 2 * dp * 4   # bf16 attn in + f32 resid + f32 out
    fixed3 = 2 * nq_pad * dp * 2
    tm3 = _pick_tile_rows(rows, per_row3, fixed3, tile_rows, budget)
    rows_p3 = _round_up(rows, tm3)
    a2p = _pad2(attn, rows_p3, nq_pad)
    r2p = _pad2(x2, rows_p3, dp)
    out = _oproj_residual(a2p, wo_t, r2p, tile_rows=tm3, vmem_limit=vmem_limit)
    return out[:rows, :D].reshape(B, S, D)


# ---------------------------------------------------------------------------
# pure-JAX reference (mirrors the torch module)
# ---------------------------------------------------------------------------
def mha_reference(x, norm_scale, split_scale, wq, wk, wv, wo, *,
                  head_dims=64, gqa_num_heads=2, eps=1e-8):
    B, S, D = x.shape
    hd = head_dims
    H = D // hd
    G = gqa_num_heads
    norm = jnp.sqrt(jnp.sum(x * x, axis=-1, keepdims=True)) * (D ** -0.5)
    y = norm_scale * x / (norm + eps) * split_scale
    q = (y @ wq.T).reshape(B, S, H, hd).transpose(0, 2, 1, 3)
    k = (y @ wk.T).reshape(B, S, G, hd).transpose(0, 2, 1, 3)
    v = (y @ wv.T).reshape(B, S, G, hd).transpose(0, 2, 1, 3)
    kv_idx = jnp.arange(H) % G
    s = jnp.einsum("bhqd,bhkd->bhqk", q, k[:, kv_idx]) * hd ** -0.5
    p = jax.nn.softmax(s, axis=-1)
    o = jnp.einsum("bhqk,bhkd->bhqd", p, v[:, kv_idx])
    o = o.transpose(0, 2, 1, 3).reshape(B, S, H * hd)
    return x + o @ wo.T


if __name__ == "__main__":
    # dims must be a multiple of head_dims=64 and num_heads must equal
    # gqa_num_heads (module constraint) -> dims=128, 2 heads.
    B, S, D, HD, G = 2, 8, 128, 64, 2
    NQ, NKV = (D // HD) * HD, G * HD

    key = jax.random.PRNGKey(0)
    kx, kq, kk, kv_, ko = jax.random.split(key, 5)

    x = jax.random.normal(kx, (B, S, D), dtype=jnp.float32)
    norm_scale = jnp.ones((D,), jnp.float32)             # RMSNorm.scale = ones(D)
    split_scale = jnp.zeros((D,), jnp.float32) + 0.1     # RMS_split.scale = zeros(D)+0.1
    wq = jax.random.normal(kq, (NQ, D), jnp.float32) * 0.05
    wk = jax.random.normal(kk, (NKV, D), jnp.float32) * 0.05
    wv = jax.random.normal(kv_, (NKV, D), jnp.float32) * 0.05
    wo = jax.random.normal(ko, (D, NQ), jnp.float32) * 0.05

    out = mha_forward(x, norm_scale, split_scale, wq, wk, wv, wo,
                      head_dims=HD, gqa_num_heads=G)
    out = jax.block_until_ready(out)

    ref = mha_reference(x, norm_scale, split_scale, wq, wk, wv, wo,
                        head_dims=HD, gqa_num_heads=G)
    assert out.shape == (B, S, D), out.shape
    # bf16 intermediates + bf16 MXU feed + approx EUP reciprocal in the softmax
    # normalize -> compare with loosened tolerance.
    assert jnp.allclose(out, ref, atol=2e-2, rtol=2e-2), \
        float(jnp.max(jnp.abs(out - ref)))

    print("KERNEL_OK")
</pallas_src>

<mosaic_0001>
module attributes {stable_mosaic.version = 11 : i64} {
  func.func @_rms_qkv_kernel(%arg0: i32, %arg1: memref<16x128xf32, #tpu.memory_space<vmem>>, %arg2: memref<128x384xbf16, #tpu.memory_space<vmem>>, %arg3: memref<16x384xbf16, #tpu.memory_space<vmem>>) attributes {dimension_semantics = [#tpu.dimension_semantics<parallel>], iteration_bounds = array<i64: 1>, scalar_prefetch = 0 : i64, scratch_operands = 0 : i64, tpu.core_type = #tpu.core_type<tc>, window_params = [{transform_indices = @transform_0, window_bounds = array<i64: 16, 128>}, {pipeline_mode = #tpu.pipeline_mode<synchronous>, transform_indices = @transform_1, window_bounds = array<i64: 128, 384>}, {transform_indices = @transform_2, window_bounds = array<i64: 16, 384>}]} {
    %c0 = arith.constant 0 : index
    %c0_0 = arith.constant 0 : index
    %0 = vector.load %arg1[%c0, %c0_0] : memref<16x128xf32, #tpu.memory_space<vmem>>, vector<16x128xf32>
    %1 = arith.mulf %0, %0 : vector<16x128xf32>
    %cst = arith.constant dense<0.000000e+00> : vector<16xf32>
    %2 = vector.multi_reduction <add>, %1, %cst [1] : vector<16x128xf32> to vector<16xf32>
    %3 = vector.shape_cast %2 : vector<16xf32> to vector<16x1xf32>
    %4 = math.sqrt %3 : vector<16x1xf32>
    %cst_1 = arith.constant 0.0883883461 : f32
    %5 = vector.broadcast %cst_1 : f32 to vector<16x1xf32>
    %6 = arith.mulf %4, %5 : vector<16x1xf32>
    %cst_2 = arith.constant 9.99999993E-9 : f32
    %7 = vector.broadcast %cst_2 : f32 to vector<16x1xf32>
    %8 = arith.addf %6, %7 : vector<16x1xf32>
    %cst_3 = arith.constant 1.000000e+00 : f32
    %9 = vector.broadcast %cst_3 : f32 to vector<16x1xf32>
    %10 = arith.divf %9, %8 : vector<16x1xf32>
    %11 = vector.broadcast %10 : vector<16x1xf32> to vector<16x128xf32>
    %12 = arith.mulf %0, %11 : vector<16x128xf32>
    %13 = arith.truncf %12 : vector<16x128xf32> to vector<16x128xbf16>
    %c0_4 = arith.constant 0 : index
    %c0_5 = arith.constant 0 : index
    %14 = vector.load %arg2[%c0_4, %c0_5] : memref<128x384xbf16, #tpu.memory_space<vmem>>, vector<128x384xbf16>
    %cst_6 = arith.constant dense<0.000000e+00> : vector<16x384xf32>
    %15 = tpu.matmul %13, %14, %cst_6 {dimension_numbers = #tpu.dot_dimension_numbers<[1], [0], [0], [1], [0, 0, 1, 1], [], []>} : vector<16x128xbf16>, vector<128x384xbf16>, vector<16x384xf32> -> vector<16x384xf32>
    %16 = arith.truncf %15 : vector<16x384xf32> to vector<16x384xbf16>
    %c0_7 = arith.constant 0 : index
    %c0_8 = arith.constant 0 : index
    %17 = vector.load %arg3[%c0_7, %c0_8] : memref<16x384xbf16, #tpu.memory_space<vmem>>, vector<16x384xbf16>
    tpu.vector_store %arg3[%c0_7, %c0_8], %16 {strides = array<i32>} : memref<16x384xbf16, #tpu.memory_space<vmem>>, vector<16x384xbf16>,
    return
  }
  func.func @transform_0(%arg0: i32) -> (i32, i32) {
    %c0_i32 = arith.constant 0 : i32
    %c0_i32_0 = arith.constant 0 : i32
    return %arg0, %c0_i32 : i32, i32
  }
  func.func @transform_1(%arg0: i32) -> (i32, i32) {
    %c0_i32 = arith.constant 0 : i32
    %c0_i32_0 = arith.constant 0 : i32
    %c0_i32_1 = arith.constant 0 : i32
    return %c0_i32, %c0_i32_0 : i32, i32
  }
  func.func @transform_2(%arg0: i32) -> (i32, i32) {
    %c0_i32 = arith.constant 0 : i32
    %c0_i32_0 = arith.constant 0 : i32
    return %arg0, %c0_i32 : i32, i32
  }
}

</mosaic_0001>

<llo_original>
// kernel: tpu_custom_call.1
$region0: #{tpu_custom_call.1}
  #allocation0 [shape = 'u32[]', space=smem, size = 0x4, offset = 0x4, fixed_abs, tag = 'smem constant byte address 0x4 - core index']
  #allocation1 [shape = 'u32[72,128]{1,0:T(1,128)}', space=vmem, size = 0x9000, scoped, tag = 'internal scratch']
  %s0 = inlined_call_operand.hbm [shape: f32[16,128], index: 0, kind: input, shape index: {}]
  %s1 = inlined_call_operand.hbm [shape: bf16[128,384], index: 1, kind: input, shape index: {}]
  %s2 = inlined_call_operand.hbm [shape: bf16[16,384], index: 2, kind: output, shape index: {}]
  %s3 = sld [smem:[#allocation0]]
  $region26: #{tpu_custom_call.1} parent=0
    _
  %s5 = ssub.s32 1, %s3
  %s6 = scalar_select 0, %s5, %s3
  $region1: #{tpu_custom_call.1} parent=0
    #allocation2 [shape = 'u8[8192]{0}', space=vmem, size = 0x2000, scoped, tag = 'input window, operand 0, single buffered']
    #allocation3 [shape = 's32[1]{0}', space=sflag, size = 0x4, scoped, tag = 'scoped memory for tpu_custom_call.1']
    #allocation4 [shape = 's32[1]{0}', space=sflag, size = 0x4, scoped, tag = 'scoped memory for tpu_custom_call.1']
    #allocation5 [shape = 'u8[98304]{0}', space=vmem, size = 0x18000, scoped, tag = 'input window, operand 1, single buffered']
    #allocation6 [shape = 's32[1]{0}', space=sflag, size = 0x4, scoped, tag = 'scoped memory for tpu_custom_call.1']
    #allocation7 [shape = 'u8[12288]{0}', space=vmem, size = 0x3000, scoped, tag = 'output window, operand 0, single buffered']
    %7 = vsyncpa [#allocation3], 0
    %8 = vsyncpa [#allocation6], 0
    %9 = vsyncpa [#allocation4], 0
    // Predicated region
    $region2: #{tpu_custom_call.1} parent=1 // pred_check
      _
    $region3: #{tpu_custom_call.1} parent=1 // pred_check_branch
      %11 = sbr.rel (0) target = $region5
    $region4: #{tpu_custom_call.1} parent=1 // pred_region
      %13 = vsyncadd [#allocation3], 0
      %s14 = sshll.u32 %s0, 4
      %s15 = int_to_ptr.hbm [resolvable:$true] %s14
      %s16 = sshll.u32 [#allocation2], 4
      %s17 = int_to_ptr.vmem [resolvable:$true] %s16
      %22 = dma.hbm_to_vmem [thread:$0]  %s15, 256, %s17, [#allocation3], 128, 128, 8
    $region5: #{tpu_custom_call.1} parent=1 // pred_fallthru
      _
    // Predicated region
    $region6: #{tpu_custom_call.1} parent=1 // pred_check
      _
    $region7: #{tpu_custom_call.1} parent=1 // pred_check_branch
      %24 = sbr.rel (0) target = $region9
    $region8: #{tpu_custom_call.1} parent=1 // pred_region
      %26 = vsyncadd [#allocation6], 0
      %s27 = sshll.u32 %s1, 4
      %s28 = int_to_ptr.hbm [resolvable:$true] %s27
      %s29 = sshll.u32 [#allocation5], 4
      %s30 = int_to_ptr.vmem [resolvable:$true] %s29
      %35 = dma.hbm_to_vmem [thread:$0]  %s28, 3072, %s30, [#allocation6], 192, 192, 12
    $region9: #{tpu_custom_call.1} parent=1 // pred_fallthru
      _
    // Predicated region
    $region10: #{tpu_custom_call.1} parent=1 // pred_check
      _
    $region11: #{tpu_custom_call.1} parent=1 // pred_check_branch
      %37 = sbr.rel (0) target = $region13
    $region12: #{tpu_custom_call.1} parent=1 // pred_region
      %39 = dma.done [#allocation3], 256
    $region13: #{tpu_custom_call.1} parent=1 // pred_fallthru
      _
    // Predicated region
    $region14: #{tpu_custom_call.1} parent=1 // pred_check
      _
    $region15: #{tpu_custom_call.1} parent=1 // pred_check_branch
      %41 = sbr.rel (0) target = $region17
    $region16: #{tpu_custom_call.1} parent=1 // pred_region
      %43 = dma.done [#allocation6], 3072
    $region17: #{tpu_custom_call.1} parent=1 // pred_fallthru
      _
    %v44 = vld [vmem:[#allocation2] sm:$0xff]
    %v45 = vld [vmem:[#allocation2 + $0x8] sm:$0xff]
    %v46 = vmul.f32 %v44, %v44
    %v47 = vmul.f32 %v45, %v45
    %48 = vadd.xlane.f32.xlu0 %v46
    %v49 = vpop.xlane.xlu0 %48
    %50 = vadd.xlane.f32.xlu0 %v47
    %v51 = vpop.xlane.xlu0 %50
    %v52 = vrsqrt.pop %v49
    %v53 = vmul.f32 %v52, %v49
    %v54 = vmul.f32 %v53, %v52
    %v55 = vmul.f32 0.5, %v54
    %v56 = vsub.f32 1.5, %v55
    %v57 = vmul.f32 %v52, %v56
    %v58 = vmul.f32 %v49, %v57
    %vm59 = vcmp.eq.f32.partialorder %v49, inf
    %v60 = vsel %vm59, %v49, %v58
    %vm61 = vcmp.eq.f32.partialorder %v49, 0.0
    %v62 = vand.u32 %v49, 2147483648
    %v63 = vsel %vm61, %v62, %v60
    %v64 = vrsqrt.pop %v51
    %v65 = vmul.f32 %v64, %v51
    %v66 = vmul.f32 %v65, %v64
    %v67 = vmul.f32 0.5, %v66
    %v68 = vsub.f32 1.5, %v67
    %v69 = vmul.f32 %v64, %v68
    %v70 = vmul.f32 %v51, %v69
    %vm71 = vcmp.eq.f32.partialorder %v51, inf
    %v72 = vsel %vm71, %v51, %v70
    %vm73 = vcmp.eq.f32.partialorder %v51, 0.0
    %v74 = vand.u32 %v51, 2147483648
    %v75 = vsel %vm73, %v74, %v72
    %v76 = vmul.f32 %v63, 0.088388346
    %v77 = vmul.f32 %v75, 0.088388346
    %v78 = vadd.f32 %v76, 1e-08
    %v79 = vadd.f32 %v77, 1e-08
    %v80 = vrcp.pop %v78
    %v81 = vmul.f32 %v78, %v80
    %v82 = vsub.f32 1.0, %v81
    %v83 = vmul.f32 %v80, %v82
    %v84 = vadd.f32 %v80, %v83
    %vm85 = vweird.f32 %v78
    %vm86 = vweird.f32 %v80
    %vm87 = vmor %vm85, %vm86
    %v88 = vsel %vm87, %v80, %v84
    %v89 = vand.u32 2147483647, %v78
    %vm90 = vcmp.eq.f32.partialorder %v89, 8.507059e+37
    %v91 = vand.u32 %v78, 2147483648
    %v92 = vor.u32 1.1754944e-38, %v91
    %v93 = vsel %vm90, %v92, %v88
    %v94 = vmul.f32 1.0, %v93
    %v95 = vrcp.pop %v79
    %v96 = vmul.f32 %v79, %v95
    %v97 = vsub.f32 1.0, %v96
    %v98 = vmul.f32 %v95, %v97
    %v99 = vadd.f32 %v95, %v98
    %vm100 = vweird.f32 %v79
    %vm101 = vweird.f32 %v95
    %vm102 = vmor %vm100, %vm101
    %v103 = vsel %vm102, %v95, %v99
    %v104 = vand.u32 2147483647, %v79
    %vm105 = vcmp.eq.f32.partialorder %v104, 8.507059e+37
    %v106 = vand.u32 %v79, 2147483648
    %v107 = vor.u32 1.1754944e-38, %v106
    %v108 = vsel %vm105, %v107, %v103
    %v109 = vmul.f32 1.0, %v108
    %v110 = vmul.f32 %v44, %v94
    %v111 = vmul.f32 %v45, %v109
    %v112 = vpack.c.bf16 %v111, %v110
    %v113 = vld [vmem:[#allocation5] sm:$0xff]
    %v114 = vld [vmem:[#allocation5 + $0x8] sm:$0xf]
    %v115 = vld [vmem:[#allocation5 + $0xc] sm:$0xff]
    %v116 = vld [vmem:[#allocation5 + $0x14] sm:$0xf]
    %v117 = vld [vmem:[#allocation5 + $0x18] sm:$0xff]
    %v118 = vld [vmem:[#allocation5 + $0x20] sm:$0xf]
    %v119 = vld [vmem:[#allocation5 + $0x24] sm:$0xff]
    %v120 = vld [vmem:[#allocation5 + $0x2c] sm:$0xf]
    %v121 = vld [vmem:[#allocation5 + $0x30] sm:$0xff]
    %v122 = vld [vmem:[#allocation5 + $0x38] sm:$0xf]
    %v123 = vld [vmem:[#allocation5 + $0x3c] sm:$0xff]
    %v124 = vld [vmem:[#allocation5 + $0x44] sm:$0xf]
    %v125 = vld [vmem:[#allocation5 + $0x48] sm:$0xff]
    %v126 = vld [vmem:[#allocation5 + $0x50] sm:$0xf]
    %v127 = vld [vmem:[#allocation5 + $0x54] sm:$0xff]
    %v128 = vld [vmem:[#allocation5 + $0x5c] sm:$0xf]
    %v129 = vld [vmem:[#allocation5 + $0x60] sm:$0xff]
    %v130 = vld [vmem:[#allocation5 + $0x68] sm:$0xf]
    %v131 = vld [vmem:[#allocation5 + $0x6c] sm:$0xff]
    %v132 = vld [vmem:[#allocation5 + $0x74] sm:$0xf]
    %v133 = vld [vmem:[#allocation5 + $0x78] sm:$0xff]
    %v134 = vld [vmem:[#allocation5 + $0x80] sm:$0xf]
    %v135 = vld [vmem:[#allocation5 + $0x84] sm:$0xff]
    %v136 = vld [vmem:[#allocation5 + $0x8c] sm:$0xf]
    %v137 = vld [vmem:[#allocation5 + $0x90] sm:$0xff]
    %v138 = vld [vmem:[#allocation5 + $0x98] sm:$0xf]
    %v139 = vld [vmem:[#allocation5 + $0x9c] sm:$0xff]
    %v140 = vld [vmem:[#allocation5 + $0xa4] sm:$0xf]
    %v141 = vld [vmem:[#allocation5 + $0xa8] sm:$0xff]
    %v142 = vld [vmem:[#allocation5 + $0xb0] sm:$0xf]
    %v143 = vld [vmem:[#allocation5 + $0xb4] sm:$0xff]
    %v144 = vld [vmem:[#allocation5 + $0xbc] sm:$0xf]
    %v177 = vunpack.c.l.b16 %v113
    %v178 = vunpack.c.h.b16 %v113
    %v179 = vunpack.c.l.b16 %v114
    %v180 = vunpack.c.l.b16 %v115
    %v181 = vunpack.c.h.b16 %v115
    %v182 = vunpack.c.l.b16 %v116
    %v183 = vunpack.c.l.b16 %v117
    %v184 = vunpack.c.h.b16 %v117
    %v185 = vunpack.c.l.b16 %v118
    %v186 = vunpack.c.l.b16 %v119
    %v187 = vunpack.c.h.b16 %v119
    %v188 = vunpack.c.l.b16 %v120
    %v189 = vunpack.c.l.b16 %v121
    %v190 = vunpack.c.h.b16 %v121
    %v191 = vunpack.c.l.b16 %v122
    %v192 = vunpack.c.l.b16 %v123
    %v193 = vunpack.c.h.b16 %v123
    %v194 = vunpack.c.l.b16 %v124
    %v195 = vunpack.c.l.b16 %v125
    %v196 = vunpack.c.h.b16 %v125
    %v197 = vunpack.c.l.b16 %v126
    %v198 = vunpack.c.l.b16 %v127
    %v199 = vunpack.c.h.b16 %v127
    %v200 = vunpack.c.l.b16 %v128
    %v201 = vunpack.c.l.b16 %v129
    %v202 = vunpack.c.h.b16 %v129
    %v203 = vunpack.c.l.b16 %v130
    %v204 = vunpack.c.l.b16 %v131
    %v205 = vunpack.c.h.b16 %v131
    %v206 = vunpack.c.l.b16 %v132
    %v207 = vunpack.c.l.b16 %v133
    %v208 = vunpack.c.h.b16 %v133
    %v209 = vunpack.c.l.b16 %v134
    %v210 = vunpack.c.l.b16 %v135
    %v211 = vunpack.c.h.b16 %v135
    %v212 = vunpack.c.l.b16 %v136
    %v213 = vunpack.c.l.b16 %v137
    %v214 = vunpack.c.h.b16 %v137
    %v215 = vunpack.c.l.b16 %v138
    %v216 = vunpack.c.l.b16 %v139
    %v217 = vunpack.c.h.b16 %v139
    %v218 = vunpack.c.l.b16 %v140
    %v219 = vunpack.c.l.b16 %v141
    %v220 = vunpack.c.h.b16 %v141
    %v221 = vunpack.c.l.b16 %v142
    %v222 = vunpack.c.l.b16 %v143
    %v223 = vunpack.c.h.b16 %v143
    %v224 = vunpack.c.l.b16 %v144
    %v225 = vpack.c.b16 %v180, %v177
    %v226 = vpack.c.b16 %v181, %v178
    %v227 = vpack.c.b16 %v182, %v179
    %v228 = vpack.c.b16 %v186, %v183
    %v229 = vpack.c.b16 %v187, %v184
    %v230 = vpack.c.b16 %v188, %v185
    %v231 = vpack.c.b16 %v192, %v189
    %v232 = vpack.c.b16 %v193, %v190
    %v233 = vpack.c.b16 %v194, %v191
    %v234 = vpack.c.b16 %v198, %v195
    %v235 = vpack.c.b16 %v199, %v196
    %v236 = vpack.c.b16 %v200, %v197
    %v237 = vpack.c.b16 %v204, %v201
    %v238 = vpack.c.b16 %v205, %v202
    %v239 = vpack.c.b16 %v206, %v203
    %v240 = vpack.c.b16 %v210, %v207
    %v241 = vpack.c.b16 %v211, %v208
    %v242 = vpack.c.b16 %v212, %v209
    %v243 = vpack.c.b16 %v216, %v213
    %v244 = vpack.c.b16 %v217, %v214
    %v245 = vpack.c.b16 %v218, %v215
    %v246 = vpack.c.b16 %v222, %v219
    %v247 = vpack.c.b16 %v223, %v220
    %v248 = vpack.c.b16 %v224, %v221
    %273 = vmatpush.bf16.msra.mxu0 %v246
    %274 = vmatpush.bf16.msra.mxu0 %v243
    %275 = vmatpush.bf16.msra.mxu0 %v240
    %276 = vmatpush.bf16.msra.mxu0 %v237
    %277 = vmatpush.bf16.msra.mxu0 %v234
    %278 = vmatpush.bf16.msra.mxu0 %v231
    %279 = vmatpush.bf16.msra.mxu0 %v228
    %280 = vmatpush.bf16.msra.mxu0 %v225
    %281 = vmatmul.bf16.gmra.mxu0 %v112
    %v282 = vpop.f32.mrf.mxu0
    %v283 = vadd.f32 0.0, %v282
    %v284 = vpop.f32.mrf.mxu0
    %v285 = vadd.f32 0.0, %v284
    %286 = vdwg.mxu0
    %287 = vmatpush.bf16.msra.mxu0 %v247
    %288 = vmatpush.bf16.msra.mxu0 %v244
    %289 = vmatpush.bf16.msra.mxu0 %v241
    %290 = vmatpush.bf16.msra.mxu0 %v238
    %291 = vmatpush.bf16.msra.mxu0 %v235
    %292 = vmatpush.bf16.msra.mxu0 %v232
    %293 = vmatpush.bf16.msra.mxu0 %v229
    %294 = vmatpush.bf16.msra.mxu0 %v226
    %295 = vmatmul.bf16.gmra.mxu0 %v112
    %v296 = vpop.f32.mrf.mxu0
    %v297 = vadd.f32 0.0, %v296
    %v298 = vpop.f32.mrf.mxu0
    %v299 = vadd.f32 0.0, %v298
    %300 = vdwg.mxu0
    %301 = vmatpush.bf16.msra.mxu0 %v248
    %302 = vmatpush.bf16.msra.mxu0 %v245
    %303 = vmatpush.bf16.msra.mxu0 %v242
    %304 = vmatpush.bf16.msra.mxu0 %v239
    %305 = vmatpush.bf16.msra.mxu0 %v236
    %306 = vmatpush.bf16.msra.mxu0 %v233
    %307 = vmatpush.bf16.msra.mxu0 %v230
    %308 = vmatpush.bf16.msra.mxu0 %v227
    %309 = vmatmul.bf16.gmra.mxu0 %v112
    %v310 = vpop.f32.mrf.mxu0
    %v311 = vadd.f32 0.0, %v310
    %v312 = vpop.f32.mrf.mxu0
    %v313 = vadd.f32 0.0, %v312
    %314 = vdwg.mxu0
    %v315 = vpack.c.bf16 %v297, %v283
    %v316 = vpack.c.bf16 %v311, %v311
    %v317 = vpack.c.bf16 %v299, %v285
    %v318 = vpack.c.bf16 %v313, %v313
    %319 = vst [vmem:[#allocation7] sm:$0xff] %v315
    %320 = vst [vmem:[#allocation7 + $0x8] sm:$0xf] %v316
    %321 = vst [vmem:[#allocation7 + $0xc] sm:$0xff] %v317
    %322 = vst [vmem:[#allocation7 + $0x14] sm:$0xf] %v318
    // Predicated region
    $region18: #{tpu_custom_call.1} parent=1 // pred_check
      _
    $region19: #{tpu_custom_call.1} parent=1 // pred_check_branch
      %324 = sbr.rel (0) target = $region21
    $region20: #{tpu_custom_call.1} parent=1 // pred_region
      %326 = vsyncadd [#allocation4], 0
      %s327 = sshll.u32 [#allocation7], 4
      %s328 = int_to_ptr.vmem [resolvable:$true] %s327
      %s329 = sshll.u32 %s2, 4
      %s330 = int_to_ptr.hbm [resolvable:$true] %s329
      %335 = dma.vmem_to_hbm [thread:$0]  %s328, 384, %s330, [#allocation4], 192, 192, 12
    $region21: #{tpu_custom_call.1} parent=1 // pred_fallthru
      _
    // Predicated region
    $region22: #{tpu_custom_call.1} parent=1 // pred_check
      _
    $region23: #{tpu_custom_call.1} parent=1 // pred_check_branch
      %337 = sbr.rel (0) target = $region25
    $region24: #{tpu_custom_call.1} parent=1 // pred_region
      %339 = dma.done [#allocation4], 384
    $region25: #{tpu_custom_call.1} parent=1 // pred_fallthru
      _
    %340 = vsyncpa [#allocation3], 1
    %341 = vsyncpa [#allocation6], 1
    %342 = vsyncpa [#allocation4], 1

</llo_original>
